<compile_context>
chip_gen: v7x
topology: tpu7x:2x2x1
jax: 0.10.0
libtpu: 0.0.40
codegen_flags: <defaults>
</compile_context>

<pallas_src>
import functools

import jax
import jax.numpy as jnp
from jax.experimental import pallas as pl
from jax.experimental.pallas import tpu as pltpu


def _encoder_2_c_kernel(atoms_ref, wt_ref, b_ref, out_ref, *, n_atoms):
    # atoms_ref: (rows, K)   wt_ref: (K, Dout)   b_ref: (1, Dout)
    # out_ref:   (rows // n_atoms, Dout)
    x = atoms_ref[...]                                              # (rows, K)
    # Linear on the MXU: (rows, K) @ (K, Dout) + (1, Dout)
    z = jnp.dot(x, wt_ref[...], preferred_element_type=jnp.float32) + b_ref[...]
    # Numerically stable row-wise softmax over the feature (lane) dim.
    z = z - jnp.max(z, axis=-1, keepdims=True)
    e = jnp.exp(z)
    # Exact reciprocal: approx=True (EUP vrcp) can exceed the 1e-4 tolerance.
    p = e * pl.reciprocal(jnp.sum(e, axis=-1, keepdims=True), approx=False)
    # Per-sample sum over the atoms dim: (rows, Dout) -> (rows/N, N, Dout) -> sum.
    rows, d_out = p.shape
    out_ref[...] = jnp.sum(p.reshape(rows // n_atoms, n_atoms, d_out), axis=1)


def prepare_params(weight, bias):
    """One-time parameter prep (outside the per-call hot path).

    weight: (Dout, Din) f32 in PyTorch nn.Linear layout; bias: (Dout,).
    Returns wt: (Din, Dout) f32 (pre-transposed, NOT padded), bias2: (1, Dout).
    """
    d_out, d_in = weight.shape
    wt = jnp.asarray(weight, jnp.float32).T            # (Din, Dout), done once
    return wt, jnp.asarray(bias, jnp.float32).reshape(1, d_out)


def _pick_samples_per_step(b, n, max_rows=2048):
    """Whole samples per grid step; single step for small folds, ~<=2048 rows else."""
    if b * n <= max_rows:
        return b
    limit = max(1, max_rows // max(n, 1))
    for d in range(min(b, limit), 0, -1):
        if b % d == 0 and d % 8 == 0:                  # sublane-aligned output tile
            return d
    return b                                            # fallback: one big step


@jax.jit
def encoder_2_c(atoms, wt, bias2):
    """atoms: (N, Din) -> (Dout,), or (B, N, Din) -> (B, Dout).

    wt / bias2 come from prepare_params().
    """
    squeeze = atoms.ndim == 2
    if squeeze:
        atoms = atoms[None]
    b, n, d_in = atoms.shape
    k, d_out = wt.shape
    assert k == d_in, (k, d_in)

    sps = _pick_samples_per_step(b, n)                  # samples per grid step
    if b % sps:                                         # odd batch -> single step
        sps = b
    num_steps = b // sps
    rows = sps * n

    atoms2d = atoms.reshape(b * n, d_in)                # fold batch into M

    cost = pl.CostEstimate(
        flops=2 * b * n * d_in * d_out,
        transcendentals=b * n * d_out,
        bytes_accessed=4 * (b * n * d_in + d_in * d_out + d_out + b * d_out),
    )

    out = pl.pallas_call(
        functools.partial(_encoder_2_c_kernel, n_atoms=n),
        out_shape=jax.ShapeDtypeStruct((b, d_out), jnp.float32),
        grid=(num_steps,),
        in_specs=[
            # Whole-sample M chunk of the folded activations.
            pl.BlockSpec((rows, d_in), lambda i: (i, 0)),
            # Weight & bias: constant block index -> DMA'd once, VMEM-resident.
            pl.BlockSpec((d_in, d_out), lambda i: (0, 0)),
            pl.BlockSpec((1, d_out), lambda i: (0, 0)),
        ],
        out_specs=pl.BlockSpec((sps, d_out), lambda i: (i, 0)),
        compiler_params=pltpu.CompilerParams(
            # Do not split a tiny batch across v7x TensorCores (would duplicate
            # the weight DMA); grid is usually a single step anyway.
            dimension_semantics=("arbitrary",)),
        cost_estimate=cost,
    )(atoms2d, wt, bias2)

    return out[0] if squeeze else out


def _ref_forward(atoms, weight, bias):
    # Pure-JAX reference of the PyTorch forward (legacy F.softmax on 2-D -> dim=-1).
    z = atoms @ weight.T + bias
    p = jax.nn.softmax(z, axis=-1)
    return p.sum(axis=-2)


if __name__ == "__main__":
    input_dim, output_dim = 200, 512
    n_atoms = 8
    batch = 4

    key = jax.random.PRNGKey(0)
    k_x, k_w, k_b = jax.random.split(key, 3)

    # Deterministic params mimicking nn.Linear's uniform(-1/sqrt(fan_in), ...) init.
    bound = 1.0 / (input_dim ** 0.5)
    weight = jax.random.uniform(k_w, (output_dim, input_dim), jnp.float32, -bound, bound)
    bias = jax.random.uniform(k_b, (output_dim,), jnp.float32, -bound, bound)

    # One-time prep (pre-transposed weight lives outside the hot path).
    wt, b2 = prepare_params(weight, bias)

    # --- Single atom set: matches the module forward exactly -> (output_dim,) ---
    atoms = jax.random.normal(k_x, (n_atoms, input_dim), jnp.float32)
    out = encoder_2_c(atoms, wt, b2)
    jax.block_until_ready(out)
    ref = _ref_forward(atoms, weight, bias)
    assert out.shape == (output_dim,)
    assert jnp.allclose(out, ref, atol=1e-4, rtol=1e-4)

    # --- Batched path: batch folded into M, single grid step, weight DMA'd once ---
    atoms_b = jax.random.normal(k_x, (batch, n_atoms, input_dim), jnp.float32)
    out_b = encoder_2_c(atoms_b, wt, b2)
    jax.block_until_ready(out_b)
    ref_b = jax.vmap(lambda a: _ref_forward(a, weight, bias))(atoms_b)
    assert out_b.shape == (batch, output_dim)
    assert jnp.allclose(out_b, ref_b, atol=1e-4, rtol=1e-4)

    print("KERNEL_OK")
</pallas_src>

<mosaic_0001>
module attributes {stable_mosaic.version = 11 : i64} {
  func.func @_encoder_2_c_kernel(%arg0: i32, %arg1: memref<8x200xf32, #tpu.memory_space<vmem>>, %arg2: memref<200x512xf32, #tpu.memory_space<vmem>>, %arg3: memref<1x512xf32, #tpu.memory_space<vmem>>, %arg4: memref<1x512xf32, #tpu.memory_space<vmem>>) attributes {dimension_semantics = [#tpu.dimension_semantics<arbitrary>], iteration_bounds = array<i64: 1>, scalar_prefetch = 0 : i64, scratch_operands = 0 : i64, tpu.core_type = #tpu.core_type<tc>, window_params = [{transform_indices = @transform_0, window_bounds = array<i64: 8, 200>}, {pipeline_mode = #tpu.pipeline_mode<synchronous>, transform_indices = @transform_1, window_bounds = array<i64: 200, 512>}, {pipeline_mode = #tpu.pipeline_mode<synchronous>, transform_indices = @transform_2, window_bounds = array<i64: 1, 512>}, {transform_indices = @transform_3, window_bounds = array<i64: 1, 512>}]} {
    %c0 = arith.constant 0 : index
    %c0_0 = arith.constant 0 : index
    %0 = vector.load %arg1[%c0, %c0_0] : memref<8x200xf32, #tpu.memory_space<vmem>>, vector<8x200xf32>
    %c0_1 = arith.constant 0 : index
    %c0_2 = arith.constant 0 : index
    %1 = vector.load %arg2[%c0_1, %c0_2] : memref<200x512xf32, #tpu.memory_space<vmem>>, vector<200x512xf32>
    %cst = arith.constant dense<0.000000e+00> : vector<8x512xf32>
    %2 = tpu.matmul %0, %1, %cst {dimension_numbers = #tpu.dot_dimension_numbers<[1], [0], [0], [1], [0, 0, 1, 1], [], []>} : vector<8x200xf32>, vector<200x512xf32>, vector<8x512xf32> -> vector<8x512xf32>
    %c0_3 = arith.constant 0 : index
    %c0_4 = arith.constant 0 : index
    %3 = vector.load %arg3[%c0_3, %c0_4] : memref<1x512xf32, #tpu.memory_space<vmem>>, vector<1x512xf32>
    %4 = vector.broadcast %3 : vector<1x512xf32> to vector<8x512xf32>
    %5 = arith.addf %2, %4 : vector<8x512xf32>
    %cst_5 = arith.constant dense<0xFF800000> : vector<8xf32>
    %6 = vector.multi_reduction <maximumf>, %5, %cst_5 [1] : vector<8x512xf32> to vector<8xf32>
    %7 = vector.shape_cast %6 : vector<8xf32> to vector<8x1xf32>
    %8 = vector.broadcast %7 : vector<8x1xf32> to vector<8x512xf32>
    %9 = arith.subf %5, %8 : vector<8x512xf32>
    %10 = math.exp %9 : vector<8x512xf32>
    %cst_6 = arith.constant dense<0.000000e+00> : vector<8xf32>
    %11 = vector.multi_reduction <add>, %10, %cst_6 [1] : vector<8x512xf32> to vector<8xf32>
    %12 = vector.shape_cast %11 : vector<8xf32> to vector<8x1xf32>
    %13 = tpu.reciprocal %12 : vector<8x1xf32> -> vector<8x1xf32>
    %14 = vector.broadcast %13 : vector<8x1xf32> to vector<8x512xf32>
    %15 = arith.mulf %10, %14 : vector<8x512xf32>
    %16 = vector.shape_cast %15 : vector<8x512xf32> to vector<1x8x512xf32>
    %cst_7 = arith.constant dense<0.000000e+00> : vector<1x512xf32>
    %17 = vector.multi_reduction <add>, %16, %cst_7 [1] : vector<1x8x512xf32> to vector<1x512xf32>
    %c0_8 = arith.constant 0 : index
    %c0_9 = arith.constant 0 : index
    %18 = vector.load %arg4[%c0_8, %c0_9] : memref<1x512xf32, #tpu.memory_space<vmem>>, vector<1x512xf32>
    tpu.vector_store %arg4[%c0_8, %c0_9], %17 {strides = array<i32>} : memref<1x512xf32, #tpu.memory_space<vmem>>, vector<1x512xf32>,
    return
  }
  func.func @transform_0(%arg0: i32) -> (i32, i32) {
    %c0_i32 = arith.constant 0 : i32
    %c0_i32_0 = arith.constant 0 : i32
    return %arg0, %c0_i32 : i32, i32
  }
  func.func @transform_1(%arg0: i32) -> (i32, i32) {
    %c0_i32 = arith.constant 0 : i32
    %c0_i32_0 = arith.constant 0 : i32
    %c0_i32_1 = arith.constant 0 : i32
    return %c0_i32, %c0_i32_0 : i32, i32
  }
  func.func @transform_2(%arg0: i32) -> (i32, i32) {
    %c0_i32 = arith.constant 0 : i32
    %c0_i32_0 = arith.constant 0 : i32
    %c0_i32_1 = arith.constant 0 : i32
    return %c0_i32, %c0_i32_0 : i32, i32
  }
  func.func @transform_3(%arg0: i32) -> (i32, i32) {
    %c0_i32 = arith.constant 0 : i32
    %c0_i32_0 = arith.constant 0 : i32
    return %arg0, %c0_i32 : i32, i32
  }
}

</mosaic_0001>

<llo_original>
// kernel: encoder_2_c.1
$region0: #{encoder_2_c.1}
  #allocation0 [shape = 'u32[]', space=smem, size = 0x4, offset = 0x4, fixed_abs, tag = 'smem constant byte address 0x4 - core index']
  #allocation1 [shape = 'u32[144,128]{1,0:T(1,128)}', space=vmem, size = 0x12000, scoped, tag = 'internal scratch']
  %s0 = inlined_call_operand.hbm [shape: f32[8,200], index: 0, kind: input, shape index: {}]
  %s1 = inlined_call_operand.hbm [shape: f32[200,512], index: 1, kind: input, shape index: {}]
  %s2 = inlined_call_operand.vmem [shape: f32[1,512], index: 2, kind: input, shape index: {}]
  %s3 = inlined_call_operand.hbm [shape: f32[1,512], index: 3, kind: output, shape index: {}]
  %s4 = sld [smem:[#allocation0]]
  $region30: #{encoder_2_c.1} parent=0
    _
  %s6 = ssub.s32 1, %s4
  %s7 = scalar_select 0, %s6, %s4
  $region1: #{encoder_2_c.1} parent=0
    #allocation2 [shape = 'u8[8192]{0}', space=vmem, size = 0x2000, scoped, tag = 'input window, operand 0, single buffered']
    #allocation3 [shape = 's32[1]{0}', space=sflag, size = 0x4, scoped, tag = 'scoped memory for encoder_2_c.1']
    #allocation4 [shape = 's32[1]{0}', space=sflag, size = 0x4, scoped, tag = 'scoped memory for encoder_2_c.1']
    #allocation5 [shape = 'u8[409600]{0}', space=vmem, size = 0x64000, scoped, tag = 'input window, operand 1, single buffered']
    #allocation6 [shape = 's32[1]{0}', space=sflag, size = 0x4, scoped, tag = 'scoped memory for encoder_2_c.1']
    #allocation7 [shape = 'u8[2048]{0}', space=vmem, size = 0x800, scoped, tag = 'output window, operand 0, single buffered']
    %8 = vsyncpa [#allocation3], 0
    %9 = vsyncpa [#allocation6], 0
    %10 = vsyncpa [#allocation4], 0
    // Predicated region
    $region2: #{encoder_2_c.1} parent=1 // pred_check
      _
    $region3: #{encoder_2_c.1} parent=1 // pred_check_branch
      %12 = sbr.rel (0) target = $region5
    $region4: #{encoder_2_c.1} parent=1 // pred_region
      %s14 = ssub.s32 256, 256
      %15 = vsyncadd [#allocation3], %s14
      %s17 = sshll.u32 [#allocation2], 4
      %s18 = int_to_ptr.vmem [resolvable:$true] %s17
      %20 = dma.hbm_to_vmem [thread:$0]  %s0, 256, %s18, [#allocation3]
    $region5: #{encoder_2_c.1} parent=1 // pred_fallthru
      _
    // Predicated region
    $region6: #{encoder_2_c.1} parent=1 // pred_check
      _
    $region7: #{encoder_2_c.1} parent=1 // pred_check_branch
      %22 = sbr.rel (0) target = $region9
    $region8: #{encoder_2_c.1} parent=1 // pred_region
      %s24 = ssub.s32 12800, 12800
      %25 = vsyncadd [#allocation6], %s24
      %s26 = sshll.u32 [#allocation5], 4
      %s27 = int_to_ptr.vmem [resolvable:$true] %s26
      %32 = dma.hbm_to_vmem [thread:$0]  %s1, 12800, %s27, [#allocation6], 512, 512, 32
    $region9: #{encoder_2_c.1} parent=1 // pred_fallthru
      _
    // Predicated region
    $region10: #{encoder_2_c.1} parent=1 // pred_check
      _
    $region11: #{encoder_2_c.1} parent=1 // pred_check_branch
      %34 = sbr.rel (0) target = $region13
    $region12: #{encoder_2_c.1} parent=1 // pred_region
      _
    $region13: #{encoder_2_c.1} parent=1 // pred_fallthru
      _
    // Predicated region
    $region14: #{encoder_2_c.1} parent=1 // pred_check
      _
    $region15: #{encoder_2_c.1} parent=1 // pred_check_branch
      %36 = sbr.rel (0) target = $region17
    $region16: #{encoder_2_c.1} parent=1 // pred_region
      %37 = dma.done [#allocation3], 256
    $region17: #{encoder_2_c.1} parent=1 // pred_fallthru
      _
    // Predicated region
    $region18: #{encoder_2_c.1} parent=1 // pred_check
      _
    $region19: #{encoder_2_c.1} parent=1 // pred_check_branch
      %39 = sbr.rel (0) target = $region21
    $region20: #{encoder_2_c.1} parent=1 // pred_region
      %40 = dma.done [#allocation6], 12800
    $region21: #{encoder_2_c.1} parent=1 // pred_fallthru
      _
    %v41 = vld [vmem:[#allocation2] sm:$0xff]
    %v42 = vld [vmem:[#allocation2 + $0x8] sm:$0xff]
    %v43 = vld [vmem:[#allocation5] sm:$0xff]
    %v44 = vld [vmem:[#allocation5 + $0x8] sm:$0xff]
    %v45 = vld [vmem:[#allocation5 + $0x10] sm:$0xff]
    %v46 = vld [vmem:[#allocation5 + $0x18] sm:$0xff]
    %v47 = vld [vmem:[#allocation5 + $0x20] sm:$0xff]
    %v48 = vld [vmem:[#allocation5 + $0x28] sm:$0xff]
    %v49 = vld [vmem:[#allocation5 + $0x30] sm:$0xff]
    %v50 = vld [vmem:[#allocation5 + $0x38] sm:$0xff]
    %v51 = vld [vmem:[#allocation5 + $0x40] sm:$0xff]
    %v52 = vld [vmem:[#allocation5 + $0x48] sm:$0xff]
    %v53 = vld [vmem:[#allocation5 + $0x50] sm:$0xff]
    %v54 = vld [vmem:[#allocation5 + $0x58] sm:$0xff]
    %v55 = vld [vmem:[#allocation5 + $0x60] sm:$0xff]
    %v56 = vld [vmem:[#allocation5 + $0x68] sm:$0xff]
    %v57 = vld [vmem:[#allocation5 + $0x70] sm:$0xff]
    %v58 = vld [vmem:[#allocation5 + $0x78] sm:$0xff]
    %v59 = vld [vmem:[#allocation5 + $0x80] sm:$0xff]
    %v60 = vld [vmem:[#allocation5 + $0x88] sm:$0xff]
    %v61 = vld [vmem:[#allocation5 + $0x90] sm:$0xff]
    %v62 = vld [vmem:[#allocation5 + $0x98] sm:$0xff]
    %v63 = vld [vmem:[#allocation5 + $0xa0] sm:$0xff]
    %v64 = vld [vmem:[#allocation5 + $0xa8] sm:$0xff]
    %v65 = vld [vmem:[#allocation5 + $0xb0] sm:$0xff]
    %v66 = vld [vmem:[#allocation5 + $0xb8] sm:$0xff]
    %v67 = vld [vmem:[#allocation5 + $0xc0] sm:$0xff]
    %v68 = vld [vmem:[#allocation5 + $0xc8] sm:$0xff]
    %v69 = vld [vmem:[#allocation5 + $0xd0] sm:$0xff]
    %v70 = vld [vmem:[#allocation5 + $0xd8] sm:$0xff]
    %v71 = vld [vmem:[#allocation5 + $0xe0] sm:$0xff]
    %v72 = vld [vmem:[#allocation5 + $0xe8] sm:$0xff]
    %v73 = vld [vmem:[#allocation5 + $0xf0] sm:$0xff]
    %v74 = vld [vmem:[#allocation5 + $0xf8] sm:$0xff]
    %v75 = vld [vmem:[#allocation5 + $0x100] sm:$0xff]
    %v76 = vld [vmem:[#allocation5 + $0x108] sm:$0xff]
    %v77 = vld [vmem:[#allocation5 + $0x110] sm:$0xff]
    %v78 = vld [vmem:[#allocation5 + $0x118] sm:$0xff]
    %v79 = vld [vmem:[#allocation5 + $0x120] sm:$0xff]
    %v80 = vld [vmem:[#allocation5 + $0x128] sm:$0xff]
    %v81 = vld [vmem:[#allocation5 + $0x130] sm:$0xff]
    %v82 = vld [vmem:[#allocation5 + $0x138] sm:$0xff]
    %v83 = vld [vmem:[#allocation5 + $0x140] sm:$0xff]
    %v84 = vld [vmem:[#allocation5 + $0x148] sm:$0xff]
    %v85 = vld [vmem:[#allocation5 + $0x150] sm:$0xff]
    %v86 = vld [vmem:[#allocation5 + $0x158] sm:$0xff]
    %v87 = vld [vmem:[#allocation5 + $0x160] sm:$0xff]
    %v88 = vld [vmem:[#allocation5 + $0x168] sm:$0xff]
    %v89 = vld [vmem:[#allocation5 + $0x170] sm:$0xff]
    %v90 = vld [vmem:[#allocation5 + $0x178] sm:$0xff]
    %v91 = vld [vmem:[#allocation5 + $0x180] sm:$0xff]
    %v92 = vld [vmem:[#allocation5 + $0x188] sm:$0xff]
    %v93 = vld [vmem:[#allocation5 + $0x190] sm:$0xff]
    %v94 = vld [vmem:[#allocation5 + $0x198] sm:$0xff]
    %v95 = vld [vmem:[#allocation5 + $0x1a0] sm:$0xff]
    %v96 = vld [vmem:[#allocation5 + $0x1a8] sm:$0xff]
    %v97 = vld [vmem:[#allocation5 + $0x1b0] sm:$0xff]
    %v98 = vld [vmem:[#allocation5 + $0x1b8] sm:$0xff]
    %v99 = vld [vmem:[#allocation5 + $0x1c0] sm:$0xff]
    %v100 = vld [vmem:[#allocation5 + $0x1c8] sm:$0xff]
    %v101 = vld [vmem:[#allocation5 + $0x1d0] sm:$0xff]
    %v102 = vld [vmem:[#allocation5 + $0x1d8] sm:$0xff]
    %v103 = vld [vmem:[#allocation5 + $0x1e0] sm:$0xff]
    %v104 = vld [vmem:[#allocation5 + $0x1e8] sm:$0xff]
    %v105 = vld [vmem:[#allocation5 + $0x1f0] sm:$0xff]
    %v106 = vld [vmem:[#allocation5 + $0x1f8] sm:$0xff]
    %v107 = vld [vmem:[#allocation5 + $0x200] sm:$0xff]
    %v108 = vld [vmem:[#allocation5 + $0x208] sm:$0xff]
    %v109 = vld [vmem:[#allocation5 + $0x210] sm:$0xff]
    %v110 = vld [vmem:[#allocation5 + $0x218] sm:$0xff]
    %v111 = vld [vmem:[#allocation5 + $0x220] sm:$0xff]
    %v112 = vld [vmem:[#allocation5 + $0x228] sm:$0xff]
    %v113 = vld [vmem:[#allocation5 + $0x230] sm:$0xff]
    %v114 = vld [vmem:[#allocation5 + $0x238] sm:$0xff]
    %v115 = vld [vmem:[#allocation5 + $0x240] sm:$0xff]
    %v116 = vld [vmem:[#allocation5 + $0x248] sm:$0xff]
    %v117 = vld [vmem:[#allocation5 + $0x250] sm:$0xff]
    %v118 = vld [vmem:[#allocation5 + $0x258] sm:$0xff]
    %v119 = vld [vmem:[#allocation5 + $0x260] sm:$0xff]
    %v120 = vld [vmem:[#allocation5 + $0x268] sm:$0xff]
    %v121 = vld [vmem:[#allocation5 + $0x270] sm:$0xff]
    %v122 = vld [vmem:[#allocation5 + $0x278] sm:$0xff]
    %v123 = vld [vmem:[#allocation5 + $0x280] sm:$0xff]
    %v124 = vld [vmem:[#allocation5 + $0x288] sm:$0xff]
    %v125 = vld [vmem:[#allocation5 + $0x290] sm:$0xff]
    %v126 = vld [vmem:[#allocation5 + $0x298] sm:$0xff]
    %v127 = vld [vmem:[#allocation5 + $0x2a0] sm:$0xff]
    %v128 = vld [vmem:[#allocation5 + $0x2a8] sm:$0xff]
    %v129 = vld [vmem:[#allocation5 + $0x2b0] sm:$0xff]
    %v130 = vld [vmem:[#allocation5 + $0x2b8] sm:$0xff]
    %v131 = vld [vmem:[#allocation5 + $0x2c0] sm:$0xff]
    %v132 = vld [vmem:[#allocation5 + $0x2c8] sm:$0xff]
    %v133 = vld [vmem:[#allocation5 + $0x2d0] sm:$0xff]
    %v134 = vld [vmem:[#allocation5 + $0x2d8] sm:$0xff]
    %v135 = vld [vmem:[#allocation5 + $0x2e0] sm:$0xff]
    %v136 = vld [vmem:[#allocation5 + $0x2e8] sm:$0xff]
    %v137 = vld [vmem:[#allocation5 + $0x2f0] sm:$0xff]
    %v138 = vld [vmem:[#allocation5 + $0x2f8] sm:$0xff]
    %v139 = vld [vmem:[#allocation5 + $0x300] sm:$0xff]
    %v140 = vld [vmem:[#allocation5 + $0x308] sm:$0xff]
    %v141 = vld [vmem:[#allocation5 + $0x310] sm:$0xff]
    %v142 = vld [vmem:[#allocation5 + $0x318] sm:$0xff]
    %v143 = vld [vmem:[%s2] sm:$0xf]
    %v145 = vlaneseq
    %v146 = vshrl.u32 %v145, 7
    %v147 = vsub.s32 0, %v146
    %v148 = vrot.slane %v143, %v147
    %v149 = vlaneseq
    %v150 = vshrl.u32 %v149, 7
    %v151 = vsub.s32 1, %v150
    %v152 = vrot.slane %v143, %v151
    %v153 = vlaneseq
    %v154 = vshrl.u32 %v153, 7
    %v155 = vsub.s32 2, %v154
    %v156 = vrot.slane %v143, %v155
    %v157 = vlaneseq
    %v158 = vshrl.u32 %v157, 7
    %v159 = vsub.s32 3, %v158
    %v160 = vrot.slane %v143, %v159
    %vm165 = vcmask 588800
    %v167 = vsel %vm165, %v42, 0
    %169 = vmatprep.subr.mxu0 %v44
    %170 = vmatpush1.msra.mxu0 %v43
    %171 = vmatprep.subr.mxu0 %v48
    %172 = vmatpush1.msra.mxu0 %v47
    %173 = vmatprep.subr.mxu0 %v52
    %174 = vmatpush1.msra.mxu0 %v51
    %175 = vmatprep.subr.mxu0 %v56
    %176 = vmatpush1.msra.mxu0 %v55
    %177 = vmatprep.subr.mxu0 %v60
    %178 = vmatpush1.msra.mxu0 %v59
    %179 = vmatprep.subr.mxu0 %v64
    %180 = vmatpush1.msra.mxu0 %v63
    %181 = vmatprep.subr.mxu0 %v68
    %182 = vmatpush1.msra.mxu0 %v67
    %183 = vmatprep.subr.mxu0 %v72
    %184 = vmatpush1.msra.mxu0 %v71
    %185 = vmatprep.subr.mxu0 %v76
    %186 = vmatpush1.msra.mxu0 %v75
    %187 = vmatprep.subr.mxu0 %v80
    %188 = vmatpush1.msra.mxu0 %v79
    %189 = vmatprep.subr.mxu0 %v84
    %190 = vmatpush1.msra.mxu0 %v83
    %191 = vmatprep.subr.mxu0 %v88
    %192 = vmatpush1.msra.mxu0 %v87
    %193 = vmatprep.subr.mxu0 %v92
    %194 = vmatpush1.msra.mxu0 %v91
    %195 = vmatprep.subr.mxu0 %v96
    %196 = vmatpush1.msra.mxu0 %v95
    %197 = vmatprep.subr.mxu0 %v100
    %198 = vmatpush1.msra.mxu0 %v99
    %199 = vmatprep.subr.mxu0 %v104
    %200 = vmatpush1.msra.mxu0 %v103
    %201 = vmatprep.subr.mxu0 %v108
    %202 = vmatpush1.msra.mxu0 %v107
    %203 = vmatprep.subr.mxu0 %v112
    %204 = vmatpush1.msra.mxu0 %v111
    %205 = vmatprep.subr.mxu0 %v116
    %206 = vmatpush1.msra.mxu0 %v115
    %207 = vmatprep.subr.mxu0 %v120
    %208 = vmatpush1.msra.mxu0 %v119
    %209 = vmatprep.subr.mxu0 %v124
    %210 = vmatpush1.msra.mxu0 %v123
    %211 = vmatprep.subr.mxu0 %v128
    %212 = vmatpush1.msra.mxu0 %v127
    %213 = vmatprep.subr.mxu0 %v132
    %214 = vmatpush1.msra.mxu0 %v131
    %215 = vmatprep.subr.mxu0 %v136
    %216 = vmatpush1.msra.mxu0 %v135
    %217 = vmatprep.subr.mxu0 %v140
    %218 = vmatpush1.msra.mxu0 %v139
    %219 = vmatprep.subr.mxu0 0.0
    %220 = vmatpush1.msra.mxu0 0.0
    %221 = vmatprep.subr.mxu0 0.0
    %222 = vmatpush1.msra.mxu0 0.0
    %223 = vmatprep.subr.mxu0 0.0
    %224 = vmatpush1.msra.mxu0 0.0
    %225 = vmatprep.subr.mxu0 0.0
    %226 = vmatpush1.msra.mxu0 0.0
    %227 = vmatprep.subr.mxu0 0.0
    %228 = vmatpush1.msra.mxu0 0.0
    %229 = vmatprep.subr.mxu0 0.0
    %230 = vmatpush1.msra.mxu0 0.0
    %231 = vmatprep.subr.mxu0 0.0
    %232 = vmatpush1.msra.mxu0 0.0
    %233 = vmatprep.mubr.f32.mxu0 %v167
    %234 = vmatmul.mubr.f32.gmra.mrb[0].mxu0 %v41
    %v235 = vpop.f32.mrb[0].mxu0
    %v236 = vadd.f32 %v148, %v235
    %v237 = vpop.f32.mrb[0].mxu0
    %v238 = vadd.f32 %v152, %v237
    %239 = vdwg.mxu0
    %240 = vmatprep.subr.mxu0 %v46
    %241 = vmatpush1.msra.mxu0 %v45
    %242 = vmatprep.subr.mxu0 %v50
    %243 = vmatpush1.msra.mxu0 %v49
    %244 = vmatprep.subr.mxu0 %v54
    %245 = vmatpush1.msra.mxu0 %v53
    %246 = vmatprep.subr.mxu0 %v58
    %247 = vmatpush1.msra.mxu0 %v57
    %248 = vmatprep.subr.mxu0 %v62
    %249 = vmatpush1.msra.mxu0 %v61
    %250 = vmatprep.subr.mxu0 %v66
    %251 = vmatpush1.msra.mxu0 %v65
    %252 = vmatprep.subr.mxu0 %v70
    %253 = vmatpush1.msra.mxu0 %v69
    %254 = vmatprep.subr.mxu0 %v74
    %255 = vmatpush1.msra.mxu0 %v73
    %256 = vmatprep.subr.mxu0 %v78
    %257 = vmatpush1.msra.mxu0 %v77
    %258 = vmatprep.subr.mxu0 %v82
    %259 = vmatpush1.msra.mxu0 %v81
    %260 = vmatprep.subr.mxu0 %v86
    %261 = vmatpush1.msra.mxu0 %v85
    %262 = vmatprep.subr.mxu0 %v90
    %263 = vmatpush1.msra.mxu0 %v89
    %264 = vmatprep.subr.mxu0 %v94
    %265 = vmatpush1.msra.mxu0 %v93
    %266 = vmatprep.subr.mxu0 %v98
    %267 = vmatpush1.msra.mxu0 %v97
    %268 = vmatprep.subr.mxu0 %v102
    %269 = vmatpush1.msra.mxu0 %v101
    %270 = vmatprep.subr.mxu0 %v106
    %271 = vmatpush1.msra.mxu0 %v105
    %272 = vmatprep.subr.mxu0 %v110
    %273 = vmatpush1.msra.mxu0 %v109
    %274 = vmatprep.subr.mxu0 %v114
    %275 = vmatpush1.msra.mxu0 %v113
    %276 = vmatprep.subr.mxu0 %v118
    %277 = vmatpush1.msra.mxu0 %v117
    %278 = vmatprep.subr.mxu0 %v122
    %279 = vmatpush1.msra.mxu0 %v121
    %280 = vmatprep.subr.mxu0 %v126
    %281 = vmatpush1.msra.mxu0 %v125
    %282 = vmatprep.subr.mxu0 %v130
    %283 = vmatpush1.msra.mxu0 %v129
    %284 = vmatprep.subr.mxu0 %v134
    %285 = vmatpush1.msra.mxu0 %v133
    %286 = vmatprep.subr.mxu0 %v138
    %287 = vmatpush1.msra.mxu0 %v137
    %288 = vmatprep.subr.mxu0 %v142
    %289 = vmatpush1.msra.mxu0 %v141
    %290 = vmatprep.subr.mxu0 0.0
    %291 = vmatpush1.msra.mxu0 0.0
    %292 = vmatprep.subr.mxu0 0.0
    %293 = vmatpush1.msra.mxu0 0.0
    %294 = vmatprep.subr.mxu0 0.0
    %295 = vmatpush1.msra.mxu0 0.0
    %296 = vmatprep.subr.mxu0 0.0
    %297 = vmatpush1.msra.mxu0 0.0
    %298 = vmatprep.subr.mxu0 0.0
    %299 = vmatpush1.msra.mxu0 0.0
    %300 = vmatprep.subr.mxu0 0.0
    %301 = vmatpush1.msra.mxu0 0.0
    %302 = vmatprep.subr.mxu0 0.0
    %303 = vmatpush1.msra.mxu0 0.0
    %304 = vmatprep.mubr.f32.mxu0 %v167
    %305 = vmatmul.mubr.f32.gmra.mrb[0].mxu0 %v41
    %v306 = vpop.f32.mrb[0].mxu0
    %v307 = vadd.f32 %v156, %v306
    %v308 = vpop.f32.mrb[0].mxu0
    %v309 = vadd.f32 %v160, %v308
    %310 = vdwg.mxu0
    %v311 = vmax.f32 %v236, %v238
    %v312 = vmax.f32 %v307, %v309
    %v313 = vmax.f32 %v311, %v312
    %314 = vmax.xlane.f32.xlu0 %v313
    %v315 = vpop.xlane.xlu0 %314
    %v316 = vsub.f32 %v236, %v315
    %v317 = vsub.f32 %v238, %v315
    %v318 = vsub.f32 %v307, %v315
    %v319 = vsub.f32 %v309, %v315
    %v320 = vmul.f32 %v316, 1.442695
    %v321 = vpow.pop %v320
    %v322 = vmul.f32 %v317, 1.442695
    %v323 = vpow.pop %v322
    %v324 = vmul.f32 %v318, 1.442695
    %v325 = vpow.pop %v324
    %v326 = vmul.f32 %v319, 1.442695
    %v327 = vpow.pop %v326
    %v328 = vadd.f32 %v321, %v323
    %v329 = vadd.f32 %v328, %v325
    %v330 = vadd.f32 %v329, %v327
    %331 = vadd.xlane.f32.xlu0 %v330
    %v332 = vpop.xlane.xlu0 %331
    %v333 = vrcp.pop %v332
    %v334 = vmul.f32 %v321, %v333
    %v335 = vmul.f32 %v323, %v333
    %v336 = vmul.f32 %v325, %v333
    %v337 = vmul.f32 %v327, %v333
    %v338 = vrot.slane %v334, 4
    %v339 = vadd.f32 %v334, %v338
    %v340 = vrot.slane %v339, 2
    %v341 = vadd.f32 %v339, %v340
    %v342 = vrot.slane %v341, 1
    %v343 = vadd.f32 %v341, %v342
    %v344 = vrot.slane %v335, 4
    %v345 = vadd.f32 %v335, %v344
    %v346 = vrot.slane %v345, 2
    %v347 = vadd.f32 %v345, %v346
    %v348 = vrot.slane %v347, 1
    %v349 = vadd.f32 %v347, %v348
    %v350 = vrot.slane %v336, 4
    %v351 = vadd.f32 %v336, %v350
    %v352 = vrot.slane %v351, 2
    %v353 = vadd.f32 %v351, %v352
    %v354 = vrot.slane %v353, 1
    %v355 = vadd.f32 %v353, %v354
    %v356 = vrot.slane %v337, 4
    %v357 = vadd.f32 %v337, %v356
    %v358 = vrot.slane %v357, 2
    %v359 = vadd.f32 %v357, %v358
    %v360 = vrot.slane %v359, 1
    %v361 = vadd.f32 %v359, %v360
    %v366 = vcombine.low %v343, %v349
    %v367 = vcombine.low %v355, %v361
    %v369 = vunpack.c.l.s4 1966171168
    %v370 = vunpack.c.0.s8 %v369
    %v371 = vlaneseq
    %v372 = vshrl.u32 %v371, 7
    %v373 = vsub.s32 %v370, %v372
    %v374 = vrot.slane %v366, %v373
    %v376 = vunpack.c.l.s4 1966171168
    %v377 = vunpack.c.0.s8 %v376
    %v378 = vlaneseq
    %v379 = vshrl.u32 %v378, 7
    %v380 = vsub.s32 %v377, %v379
    %v381 = vrot.slane %v367, %v380
    %v382 = vcombine.low %v374, %v381
    %v384 = vunpack.c.l.s4 1966171168
    %v385 = vunpack.c.0.s8 %v384
    %v386 = vlaneseq
    %v387 = vshrl.u32 %v386, 7
    %v388 = vsub.s32 %v385, %v387
    %v389 = vrot.slane %v382, %v388
    %v391 = vlaneseq
    %vm392 = vcmp.ge.s32.totalorder %v391, 0
    %vm393 = vcmp.lt.s32.totalorder %v391, 512
    %vm394 = vmand %vm392, %vm393
    %395 = vst.msk [vmem:[#allocation7] sm:$0xf] %vm394, %v389
    // Predicated region
    $region22: #{encoder_2_c.1} parent=1 // pred_check
      _
    $region23: #{encoder_2_c.1} parent=1 // pred_check_branch
      %397 = sbr.rel (0) target = $region25
    $region24: #{encoder_2_c.1} parent=1 // pred_region
      %s399 = ssub.s32 64, 64
      %400 = vsyncadd [#allocation4], %s399
      %s402 = sshll.u32 [#allocation7], 4
      %s403 = int_to_ptr.vmem [resolvable:$true] %s402
      %405 = dma.vmem_to_hbm [thread:$0]  %s403, 64, %s3, [#allocation4]
    $region25: #{encoder_2_c.1} parent=1 // pred_fallthru
      _
    // Predicated region
    $region26: #{encoder_2_c.1} parent=1 // pred_check
      _
    $region27: #{encoder_2_c.1} parent=1 // pred_check_branch
      %407 = sbr.rel (0) target = $region29
    $region28: #{encoder_2_c.1} parent=1 // pred_region
      %408 = dma.done [#allocation4], 64
    $region29: #{encoder_2_c.1} parent=1 // pred_fallthru
      _
    %409 = vsyncpa [#allocation3], 1
    %410 = vsyncpa [#allocation6], 1
    %411 = vsyncpa [#allocation4], 1

</llo_original>
